<compile_context>
chip_gen: v7x
topology: tpu7x:2x2x1
jax: 0.10.0
libtpu: 0.0.40
codegen_flags: <defaults>
</compile_context>

<pallas_src>
import functools
import math

import jax
import jax.numpy as jnp
from jax.experimental import pallas as pl
from jax.experimental.pallas import tpu as pltpu


def _convertion_kernel(T, tp_ref, u_ref,
                       wbb_ref, bbb_ref,
                       w1a_ref, w1b_ref, b1_ref,
                       w2_ref, b2_ref,
                       w3_ref, b3_ref,
                       wf_ref, bf_ref,
                       out_ref):
    TBxT, _ = tp_ref.shape
    TB = TBxT // T
    D = wbb_ref.shape[1]  # 64

    # backbone: Linear(49 -> 64) on the flattened (TB*T, 49) tile.
    # tp arrives as f32 (no wrapper-side cast pass over HBM); cast to bf16 here for the MXU,
    # accumulate in f32.
    x2 = jnp.dot(tp_ref[...].astype(jnp.bfloat16), wbb_ref[...],
                 preferred_element_type=jnp.float32) + bbb_ref[...]
    # Regroup leading dim to (TB, T, 64).  Correct for any T; layout-preserving (no VMEM
    # relayout copy) when T is a multiple of the f32 sublane tile (8), which holds here.
    x = x2.reshape(TB, T, D)

    # attention(x, fn) with fn = x[:, -1, :]  (VPU multiply + XLU reductions, no MXU)
    fn = x[:, T - 1, :]                                        # (TB, 64)
    scores = jnp.sum(x * fn[:, None, :], axis=-1)              # (TB, T) == bmm(x, fn[...,None])
    m = jnp.max(scores, axis=1, keepdims=True)
    e = jnp.exp(scores - m)
    w = e * pl.reciprocal(jnp.sum(e, axis=1, keepdims=True), approx=True)  # softmax over T
    att = jnp.sum(x * w[:, :, None], axis=1)                   # (TB, 64) == bmm(x^T, w)

    # h = cat([att, u], 1) @ W1 + b1  -- split matmul (concat-free); bf16 operands, f32 acc.
    h1 = (jnp.dot(att.astype(jnp.bfloat16), w1a_ref[...],
                  preferred_element_type=jnp.float32)
          + jnp.dot(u_ref[...].astype(jnp.bfloat16), w1b_ref[...],
                    preferred_element_type=jnp.float32)
          + b1_ref[...])
    h1 = jnp.maximum(h1, 0.0)                                  # ReLU; Dropout = identity (eval)

    h2 = jnp.maximum(jnp.dot(h1.astype(jnp.bfloat16), w2_ref[...],
                             preferred_element_type=jnp.float32) + b2_ref[...], 0.0)
    h3 = jnp.maximum(jnp.dot(h2.astype(jnp.bfloat16), w3_ref[...],
                             preferred_element_type=jnp.float32) + b3_ref[...], 0.0)

    # fc: Linear(64 -> 1) as VPU multiply + lane reduction (avoids N=1 MXU matmul).
    logit = jnp.sum(h3 * wf_ref[...], axis=-1, keepdims=True) + bf_ref[...]   # (TB, 1)
    # Lane-dense store: transpose to (1, TB) so the out block is (1, 1, TB) -> unmasked vst.
    out_ref[...] = jax.nn.sigmoid(logit.T).reshape(1, 1, TB)


def _resident_spec(shape):
    # Whole (small) weight/bias array as one block, same block index for every grid step
    # => stays resident in VMEM across the batch-tile loop.
    # (pipeline_mode=pl.Buffered(1) would also drop their second buffer; skipped to keep
    #  lowering maximally portable — the VMEM saving is small for these tiny arrays.)
    return pl.BlockSpec(shape, lambda i, _n=len(shape): (0,) * _n)


def _round_up(n, m):
    return ((n + m - 1) // m) * m


def convertion_predictor(tp, u, params, *, block_b=1024):
    """Forward pass.  params = (wbb, bbb, w1, b1, w2, b2, w3, b3, wf, bf), weights (in,out).

    block_b: target batch tile.  Sweep {512, 1024, 2048} when tuning; the tile is shrunk
    automatically if the per-step VMEM footprint would not fit v7x's 64 MiB/TC.
    """
    wbb, bbb, w1, b1, w2, b2, w3, b3, wf, bf = params
    B, T, F_in = tp.shape
    U_dim = u.shape[1]
    D = wbb.shape[1]
    H1, H2, H3 = w1.shape[1], w2.shape[1], w3.shape[1]

    # ------------------------------------------------------------------ batch tile selection
    def _vmem_est(tb_):
        # Conservative per-step footprint: double-buffered tp/u/out blocks (lane-padded),
        # resident weights, and the f32/bf16 activation temporaries.
        pad = lambda n: _round_up(max(n, 1), 128)
        tp_blk = tb_ * T * pad(F_in) * 4
        u_blk = tb_ * pad(U_dim) * 4
        out_blk = pad(tb_) * 4
        weights = 2 * (pad(D) * _round_up(F_in, 8) + pad(H1) * _round_up(D + U_dim, 8)
                       + pad(H2) * _round_up(H1, 8) + pad(H3) * _round_up(H2, 8))
        acts = (tb_ * T * (pad(F_in) * 2 + pad(D) * 4 * 2)            # bf16 tp copy, x2/x f32
                + tb_ * (pad(H1) + pad(H2) + pad(H3) + pad(D)) * 4)   # h1..h3, att
        return 2 * (tp_blk + u_blk + out_blk) + weights + acts + (4 << 20)

    VMEM_BUDGET = 28 << 20   # keeps real usage well under v7x's 64 MiB/TC (and v5e/v6e 128 MiB)

    if B <= block_b:
        tb = B                                   # single tile: blocks == full arrays (always legal)
    else:
        tb = _round_up(block_b, 8)
    while tb > 8 and _vmem_est(tb) > VMEM_BUDGET:
        tb = max(8, _round_up(tb // 2, 8))

    num_tiles = pl.cdiv(B, tb)
    # Prefer an even tile count (>=2) so ("parallel",) keeps both v7x TensorCores busy/balanced.
    if num_tiles > 1 and num_tiles % 2 == 1:
        tb = max(8, _round_up(pl.cdiv(B, num_tiles + 1), 8))
        num_tiles = pl.cdiv(B, tb)

    vmem_limit = int(min(max(2 * _vmem_est(tb), 32 << 20), 56 << 20))

    # ------------------------------------------------------------------ operand prep (cheap)
    # Split w1 into [att | u] parts -> concat-free matmul inside the kernel.
    w1a, w1b = w1[:D, :], w1[D:, :]

    # Only the tiny weights are cast to bf16 here; tp/u stay f32 (no extra HBM pass over the
    # dominant tensor) and are cast to bf16 inside the kernel.
    wbb_bf = wbb.astype(jnp.bfloat16)
    w1a_bf = w1a.astype(jnp.bfloat16)
    w1b_bf = w1b.astype(jnp.bfloat16)
    w2_bf = w2.astype(jnp.bfloat16)
    w3_bf = w3.astype(jnp.bfloat16)
    wf_row = wf.reshape(1, D).astype(jnp.float32)   # used on the VPU, keep f32

    # Free (contiguous) reshape; dtype untouched, no pad: the ragged tail of the last batch
    # tile is read as unspecified values (strictly row-local) and sliced off below.
    tp_flat = tp.reshape(B * T, F_in)

    args = (tp_flat, u, wbb_bf, bbb, w1a_bf, w1b_bf, b1,
            w2_bf, b2, w3_bf, b3, wf_row, bf)

    in_specs = [
        pl.BlockSpec((tb * T, F_in), lambda i: (i, 0)),   # tp tile: streamed / double-buffered
        pl.BlockSpec((tb, U_dim), lambda i: (i, 0)),      # u tile
        _resident_spec(wbb_bf.shape), _resident_spec(bbb.shape),
        _resident_spec(w1a_bf.shape), _resident_spec(w1b_bf.shape), _resident_spec(b1.shape),
        _resident_spec(w2_bf.shape), _resident_spec(b2.shape),
        _resident_spec(w3_bf.shape), _resident_spec(b3.shape),
        _resident_spec(wf_row.shape), _resident_spec(bf.shape),
    ]

    flops = (2 * B * T * F_in * D                 # backbone
             + 4 * B * T * D                      # attention bmm's
             + 2 * B * ((D + U_dim) * H1 + H1 * H2 + H2 * H3 + H3))
    bytes_accessed = (tp_flat.size * 4 + u.size * 4 + B * 4
                      + 2 * (wbb_bf.size + w1a_bf.size + w1b_bf.size + w2_bf.size + w3_bf.size)
                      + 4 * (bbb.size + b1.size + b2.size + b3.size + wf_row.size + bf.size))
    cost = pl.CostEstimate(flops=int(flops),
                           transcendentals=int(B * (T + 2)),
                           bytes_accessed=int(bytes_accessed))

    out = pl.pallas_call(
        functools.partial(_convertion_kernel, T),
        out_shape=jax.ShapeDtypeStruct((num_tiles, 1, tb), jnp.float32),
        grid_spec=pl.GridSpec(
            grid=(num_tiles,),
            in_specs=in_specs,
            out_specs=pl.BlockSpec((1, 1, tb), lambda i: (i, 0, 0)),
        ),
        compiler_params=pltpu.CompilerParams(
            # batch tiles are independent -> lets v7x shard them across both TensorCores
            dimension_semantics=("parallel",),
            vmem_limit_bytes=vmem_limit),
        cost_estimate=cost,
    )(*args)

    return out.reshape(num_tiles * tb)[:B].reshape(B, 1)


def _linear_params(key, fan_in, fan_out):
    # PyTorch nn.Linear default init: U(-1/sqrt(fan_in), 1/sqrt(fan_in)).
    kw, kb = jax.random.split(key)
    bound = 1.0 / math.sqrt(fan_in)
    w = jax.random.uniform(kw, (fan_in, fan_out), jnp.float32, -bound, bound)
    b = jax.random.uniform(kb, (1, fan_out), jnp.float32, -bound, bound)
    return w, b


def _reference(tp, u, params):
    # Pure-JAX f32 reference of the PyTorch forward (Dropout = identity).
    wbb, bbb, w1, b1, w2, b2, w3, b3, wf, bf = params
    x = jnp.einsum('btf,fd->btd', tp, wbb) + bbb
    fn = x[:, -1, :]
    scores = jnp.einsum('btd,bd->bt', x, fn)
    w = jax.nn.softmax(scores, axis=1)
    att = jnp.einsum('btd,bt->bd', x, w)
    h = jnp.concatenate([att, u], axis=1)
    h = jax.nn.relu(h @ w1 + b1)
    h = jax.nn.relu(h @ w2 + b2)
    h = jax.nn.relu(h @ w3 + b3)
    return jax.nn.sigmoid(h @ wf + bf)


if __name__ == "__main__":
    key = jax.random.PRNGKey(0)
    ks = jax.random.split(key, 8)

    B, T = 2, 8            # small batch / sequence
    F_IN, D = 49, 64       # backbone: Linear(49, 64)
    U_DIM = 5              # mlp expects 69 = 64 + 5

    # Inputs (stand-ins for Data_Emb outputs)
    tp = jax.random.normal(ks[0], (B, T, F_IN), jnp.float32)
    u = jax.random.normal(ks[1], (B, U_DIM), jnp.float32)

    # Parameters (deterministic, PyTorch-default-style init)
    wbb, bbb = _linear_params(ks[2], F_IN, D)          # backbone 49 -> 64
    w1, b1 = _linear_params(ks[3], D + U_DIM, 128)     # mlp[0]   69 -> 128
    w2, b2 = _linear_params(ks[4], 128, 256)           # mlp[3]  128 -> 256
    w3, b3 = _linear_params(ks[5], 256, 64)            # mlp[6]  256 -> 64
    wf, bf = _linear_params(ks[6], D, 1)               # fc       64 -> 1
    params = (wbb, bbb, w1, b1, w2, b2, w3, b3, wf, bf)

    # Small run (single grid step, full-array blocks).
    out = jax.block_until_ready(convertion_predictor(tp, u, params))
    ref = _reference(tp, u, params)
    assert out.shape == (B, 1)
    assert bool(jnp.all(jnp.isfinite(out)))
    assert bool(jnp.all((out >= 0.0) & (out <= 1.0)))
    assert float(jnp.max(jnp.abs(out - ref))) < 5e-2   # bf16 matmuls, f32 accumulation

    # Larger run: multi-step grid, resident weights, even-tile adjustment, ragged batch tail.
    B2 = 600
    tp2 = jax.random.normal(ks[7], (B2, T, F_IN), jnp.float32)
    u2 = jax.random.normal(ks[0], (B2, U_DIM), jnp.float32)
    out2 = jax.block_until_ready(convertion_predictor(tp2, u2, params, block_b=256))
    ref2 = _reference(tp2, u2, params)
    assert out2.shape == (B2, 1)
    assert bool(jnp.all(jnp.isfinite(out2)))
    assert bool(jnp.all((out2 >= 0.0) & (out2 <= 1.0)))
    assert float(jnp.max(jnp.abs(out2 - ref2))) < 5e-2

    # Default (large-tile) config on the bigger batch as well.
    out3 = jax.block_until_ready(convertion_predictor(tp2, u2, params))
    assert float(jnp.max(jnp.abs(out3 - ref2))) < 5e-2

    print("KERNEL_OK")
</pallas_src>

<mosaic_0001>
module attributes {stable_mosaic.version = 11 : i64} {
  func.func @_convertion_kernel(%arg0: i32, %arg1: memref<16x49xf32, #tpu.memory_space<vmem>>, %arg2: memref<2x5xf32, #tpu.memory_space<vmem>>, %arg3: memref<49x64xbf16, #tpu.memory_space<vmem>>, %arg4: memref<1x64xf32, #tpu.memory_space<vmem>>, %arg5: memref<64x128xbf16, #tpu.memory_space<vmem>>, %arg6: memref<5x128xbf16, #tpu.memory_space<vmem>>, %arg7: memref<1x128xf32, #tpu.memory_space<vmem>>, %arg8: memref<128x256xbf16, #tpu.memory_space<vmem>>, %arg9: memref<1x256xf32, #tpu.memory_space<vmem>>, %arg10: memref<256x64xbf16, #tpu.memory_space<vmem>>, %arg11: memref<1x64xf32, #tpu.memory_space<vmem>>, %arg12: memref<1x64xf32, #tpu.memory_space<vmem>>, %arg13: memref<1x1xf32, #tpu.memory_space<vmem>>, %arg14: memref<1x1x2xf32, #tpu.memory_space<vmem>>) attributes {dimension_semantics = [#tpu.dimension_semantics<parallel>], iteration_bounds = array<i64: 1>, scalar_prefetch = 0 : i64, scratch_operands = 0 : i64, tpu.core_type = #tpu.core_type<tc>, window_params = [{transform_indices = @transform_0, window_bounds = array<i64: 16, 49>}, {transform_indices = @transform_1, window_bounds = array<i64: 2, 5>}, {pipeline_mode = #tpu.pipeline_mode<synchronous>, transform_indices = @transform_2, window_bounds = array<i64: 49, 64>}, {pipeline_mode = #tpu.pipeline_mode<synchronous>, transform_indices = @transform_3, window_bounds = array<i64: 1, 64>}, {pipeline_mode = #tpu.pipeline_mode<synchronous>, transform_indices = @transform_4, window_bounds = array<i64: 64, 128>}, {pipeline_mode = #tpu.pipeline_mode<synchronous>, transform_indices = @transform_5, window_bounds = array<i64: 5, 128>}, {pipeline_mode = #tpu.pipeline_mode<synchronous>, transform_indices = @transform_6, window_bounds = array<i64: 1, 128>}, {pipeline_mode = #tpu.pipeline_mode<synchronous>, transform_indices = @transform_7, window_bounds = array<i64: 128, 256>}, {pipeline_mode = #tpu.pipeline_mode<synchronous>, transform_indices = @transform_8, window_bounds = array<i64: 1, 256>}, {pipeline_mode = #tpu.pipeline_mode<synchronous>, transform_indices = @transform_9, window_bounds = array<i64: 256, 64>}, {pipeline_mode = #tpu.pipeline_mode<synchronous>, transform_indices = @transform_10, window_bounds = array<i64: 1, 64>}, {pipeline_mode = #tpu.pipeline_mode<synchronous>, transform_indices = @transform_11, window_bounds = array<i64: 1, 64>}, {pipeline_mode = #tpu.pipeline_mode<synchronous>, transform_indices = @transform_12, window_bounds = array<i64: 1, 1>}, {transform_indices = @transform_13, window_bounds = array<i64: 1, 1, 2>}]} {
    %c0 = arith.constant 0 : index
    %c0_0 = arith.constant 0 : index
    %0 = vector.load %arg1[%c0, %c0_0] : memref<16x49xf32, #tpu.memory_space<vmem>>, vector<16x49xf32>
    %1 = arith.truncf %0 : vector<16x49xf32> to vector<16x49xbf16>
    %c0_1 = arith.constant 0 : index
    %c0_2 = arith.constant 0 : index
    %2 = vector.load %arg3[%c0_1, %c0_2] : memref<49x64xbf16, #tpu.memory_space<vmem>>, vector<49x64xbf16>
    %cst = arith.constant dense<0.000000e+00> : vector<16x64xf32>
    %3 = tpu.matmul %1, %2, %cst {dimension_numbers = #tpu.dot_dimension_numbers<[1], [0], [0], [1], [0, 0, 1, 1], [], []>} : vector<16x49xbf16>, vector<49x64xbf16>, vector<16x64xf32> -> vector<16x64xf32>
    %c0_3 = arith.constant 0 : index
    %c0_4 = arith.constant 0 : index
    %4 = vector.load %arg4[%c0_3, %c0_4] : memref<1x64xf32, #tpu.memory_space<vmem>>, vector<1x64xf32>
    %5 = vector.broadcast %4 : vector<1x64xf32> to vector<16x64xf32>
    %6 = arith.addf %3, %5 : vector<16x64xf32>
    %7 = vector.shape_cast %6 : vector<16x64xf32> to vector<2x8x64xf32>
    %8 = vector.extract_strided_slice %7 {offsets = [0, 7, 0], sizes = [2, 1, 64], strides = [1, 1, 1]} : vector<2x8x64xf32> to vector<2x1x64xf32>
    %9 = vector.shape_cast %8 : vector<2x1x64xf32> to vector<2x64xf32>
    %10 = vector.shape_cast %9 : vector<2x64xf32> to vector<2x1x64xf32>
    %11 = vector.broadcast %10 : vector<2x1x64xf32> to vector<2x8x64xf32>
    %12 = arith.mulf %7, %11 : vector<2x8x64xf32>
    %cst_5 = arith.constant dense<0.000000e+00> : vector<2x8xf32>
    %13 = vector.multi_reduction <add>, %12, %cst_5 [2] : vector<2x8x64xf32> to vector<2x8xf32>
    %cst_6 = arith.constant dense<0xFF800000> : vector<2xf32>
    %14 = vector.multi_reduction <maximumf>, %13, %cst_6 [1] : vector<2x8xf32> to vector<2xf32>
    %15 = vector.shape_cast %14 : vector<2xf32> to vector<2x1xf32>
    %16 = vector.broadcast %15 : vector<2x1xf32> to vector<2x8xf32>
    %17 = arith.subf %13, %16 : vector<2x8xf32>
    %18 = math.exp %17 : vector<2x8xf32>
    %cst_7 = arith.constant dense<0.000000e+00> : vector<2xf32>
    %19 = vector.multi_reduction <add>, %18, %cst_7 [1] : vector<2x8xf32> to vector<2xf32>
    %20 = vector.shape_cast %19 : vector<2xf32> to vector<2x1xf32>
    %21 = tpu.reciprocal %20 {approx = true} : vector<2x1xf32> -> vector<2x1xf32>
    %22 = vector.broadcast %21 : vector<2x1xf32> to vector<2x8xf32>
    %23 = arith.mulf %18, %22 : vector<2x8xf32>
    %24 = vector.shape_cast %23 : vector<2x8xf32> to vector<2x8x1xf32>
    %25 = vector.broadcast %24 : vector<2x8x1xf32> to vector<2x8x64xf32>
    %26 = arith.mulf %7, %25 : vector<2x8x64xf32>
    %cst_8 = arith.constant dense<0.000000e+00> : vector<2x64xf32>
    %27 = vector.multi_reduction <add>, %26, %cst_8 [1] : vector<2x8x64xf32> to vector<2x64xf32>
    %28 = arith.truncf %27 : vector<2x64xf32> to vector<2x64xbf16>
    %c0_9 = arith.constant 0 : index
    %c0_10 = arith.constant 0 : index
    %29 = vector.load %arg5[%c0_9, %c0_10] : memref<64x128xbf16, #tpu.memory_space<vmem>>, vector<64x128xbf16>
    %cst_11 = arith.constant dense<0.000000e+00> : vector<2x128xf32>
    %30 = tpu.matmul %28, %29, %cst_11 {dimension_numbers = #tpu.dot_dimension_numbers<[1], [0], [0], [1], [0, 0, 1, 1], [], []>} : vector<2x64xbf16>, vector<64x128xbf16>, vector<2x128xf32> -> vector<2x128xf32>
    %c0_12 = arith.constant 0 : index
    %c0_13 = arith.constant 0 : index
    %31 = vector.load %arg2[%c0_12, %c0_13] : memref<2x5xf32, #tpu.memory_space<vmem>>, vector<2x5xf32>
    %32 = arith.truncf %31 : vector<2x5xf32> to vector<2x5xbf16>
    %c0_14 = arith.constant 0 : index
    %c0_15 = arith.constant 0 : index
    %33 = vector.load %arg6[%c0_14, %c0_15] : memref<5x128xbf16, #tpu.memory_space<vmem>>, vector<5x128xbf16>
    %cst_16 = arith.constant dense<0.000000e+00> : vector<2x128xf32>
    %34 = tpu.matmul %32, %33, %cst_16 {dimension_numbers = #tpu.dot_dimension_numbers<[1], [0], [0], [1], [0, 0, 1, 1], [], []>} : vector<2x5xbf16>, vector<5x128xbf16>, vector<2x128xf32> -> vector<2x128xf32>
    %35 = arith.addf %30, %34 : vector<2x128xf32>
    %c0_17 = arith.constant 0 : index
    %c0_18 = arith.constant 0 : index
    %36 = vector.load %arg7[%c0_17, %c0_18] : memref<1x128xf32, #tpu.memory_space<vmem>>, vector<1x128xf32>
    %37 = vector.broadcast %36 : vector<1x128xf32> to vector<2x128xf32>
    %38 = arith.addf %35, %37 : vector<2x128xf32>
    %cst_19 = arith.constant 0.000000e+00 : f32
    %39 = vector.broadcast %cst_19 : f32 to vector<2x128xf32>
    %40 = arith.maximumf %38, %39 : vector<2x128xf32>
    %41 = arith.truncf %40 : vector<2x128xf32> to vector<2x128xbf16>
    %c0_20 = arith.constant 0 : index
    %c0_21 = arith.constant 0 : index
    %42 = vector.load %arg8[%c0_20, %c0_21] : memref<128x256xbf16, #tpu.memory_space<vmem>>, vector<128x256xbf16>
    %cst_22 = arith.constant dense<0.000000e+00> : vector<2x256xf32>
    %43 = tpu.matmul %41, %42, %cst_22 {dimension_numbers = #tpu.dot_dimension_numbers<[1], [0], [0], [1], [0, 0, 1, 1], [], []>} : vector<2x128xbf16>, vector<128x256xbf16>, vector<2x256xf32> -> vector<2x256xf32>
    %c0_23 = arith.constant 0 : index
    %c0_24 = arith.constant 0 : index
    %44 = vector.load %arg9[%c0_23, %c0_24] : memref<1x256xf32, #tpu.memory_space<vmem>>, vector<1x256xf32>
    %45 = vector.broadcast %44 : vector<1x256xf32> to vector<2x256xf32>
    %46 = arith.addf %43, %45 : vector<2x256xf32>
    %cst_25 = arith.constant 0.000000e+00 : f32
    %47 = vector.broadcast %cst_25 : f32 to vector<2x256xf32>
    %48 = arith.maximumf %46, %47 : vector<2x256xf32>
    %49 = arith.truncf %48 : vector<2x256xf32> to vector<2x256xbf16>
    %c0_26 = arith.constant 0 : index
    %c0_27 = arith.constant 0 : index
    %50 = vector.load %arg10[%c0_26, %c0_27] : memref<256x64xbf16, #tpu.memory_space<vmem>>, vector<256x64xbf16>
    %cst_28 = arith.constant dense<0.000000e+00> : vector<2x64xf32>
    %51 = tpu.matmul %49, %50, %cst_28 {dimension_numbers = #tpu.dot_dimension_numbers<[1], [0], [0], [1], [0, 0, 1, 1], [], []>} : vector<2x256xbf16>, vector<256x64xbf16>, vector<2x64xf32> -> vector<2x64xf32>
    %c0_29 = arith.constant 0 : index
    %c0_30 = arith.constant 0 : index
    %52 = vector.load %arg11[%c0_29, %c0_30] : memref<1x64xf32, #tpu.memory_space<vmem>>, vector<1x64xf32>
    %53 = vector.broadcast %52 : vector<1x64xf32> to vector<2x64xf32>
    %54 = arith.addf %51, %53 : vector<2x64xf32>
    %cst_31 = arith.constant 0.000000e+00 : f32
    %55 = vector.broadcast %cst_31 : f32 to vector<2x64xf32>
    %56 = arith.maximumf %54, %55 : vector<2x64xf32>
    %c0_32 = arith.constant 0 : index
    %c0_33 = arith.constant 0 : index
    %57 = vector.load %arg12[%c0_32, %c0_33] : memref<1x64xf32, #tpu.memory_space<vmem>>, vector<1x64xf32>
    %58 = vector.broadcast %57 : vector<1x64xf32> to vector<2x64xf32>
    %59 = arith.mulf %56, %58 : vector<2x64xf32>
    %cst_34 = arith.constant dense<0.000000e+00> : vector<2xf32>
    %60 = vector.multi_reduction <add>, %59, %cst_34 [1] : vector<2x64xf32> to vector<2xf32>
    %61 = vector.shape_cast %60 : vector<2xf32> to vector<2x1xf32>
    %c0_35 = arith.constant 0 : index
    %c0_36 = arith.constant 0 : index
    %62 = vector.load %arg13[%c0_35, %c0_36] : memref<1x1xf32, #tpu.memory_space<vmem>>, vector<1x1xf32>
    %63 = vector.broadcast %62 : vector<1x1xf32> to vector<2x1xf32>
    %64 = arith.addf %61, %63 : vector<2x1xf32>
    %65 = tpu.transpose %64, [1, 0] : vector<2x1xf32> -> vector<1x2xf32>
    %66 = arith.negf %65 : vector<1x2xf32>
    %67 = math.exp %66 : vector<1x2xf32>
    %cst_37 = arith.constant 1.000000e+00 : f32
    %68 = vector.broadcast %cst_37 : f32 to vector<1x2xf32>
    %69 = arith.addf %68, %67 : vector<1x2xf32>
    %70 = arith.divf %68, %69 : vector<1x2xf32>
    %71 = vector.shape_cast %70 : vector<1x2xf32> to vector<1x1x2xf32>
    %c0_38 = arith.constant 0 : index
    %c0_39 = arith.constant 0 : index
    %c0_40 = arith.constant 0 : index
    %72 = vector.load %arg14[%c0_38, %c0_39, %c0_40] : memref<1x1x2xf32, #tpu.memory_space<vmem>>, vector<1x1x2xf32>
    tpu.vector_store %arg14[%c0_38, %c0_39, %c0_40], %71 {strides = array<i32>} : memref<1x1x2xf32, #tpu.memory_space<vmem>>, vector<1x1x2xf32>,
    return
  }
  func.func @transform_0(%arg0: i32) -> (i32, i32) {
    %c0_i32 = arith.constant 0 : i32
    %c0_i32_0 = arith.constant 0 : i32
    return %arg0, %c0_i32 : i32, i32
  }
  func.func @transform_1(%arg0: i32) -> (i32, i32) {
    %c0_i32 = arith.constant 0 : i32
    %c0_i32_0 = arith.constant 0 : i32
    return %arg0, %c0_i32 : i32, i32
  }
  func.func @transform_2(%arg0: i32) -> (i32, i32) {
    %c0_i32 = arith.constant 0 : i32
    %c0_i32_0 = arith.constant 0 : i32
    %c0_i32_1 = arith.constant 0 : i32
    return %c0_i32, %c0_i32_0 : i32, i32
  }
  func.func @transform_3(%arg0: i32) -> (i32, i32) {
    %c0_i32 = arith.constant 0 : i32
    %c0_i32_0 = arith.constant 0 : i32
    %c0_i32_1 = arith.constant 0 : i32
    return %c0_i32, %c0_i32_0 : i32, i32
  }
  func.func @transform_4(%arg0: i32) -> (i32, i32) {
    %c0_i32 = arith.constant 0 : i32
    %c0_i32_0 = arith.constant 0 : i32
    %c0_i32_1 = arith.constant 0 : i32
    return %c0_i32, %c0_i32_0 : i32, i32
  }
  func.func @transform_5(%arg0: i32) -> (i32, i32) {
    %c0_i32 = arith.constant 0 : i32
    %c0_i32_0 = arith.constant 0 : i32
    %c0_i32_1 = arith.constant 0 : i32
    return %c0_i32, %c0_i32_0 : i32, i32
  }
  func.func @transform_6(%arg0: i32) -> (i32, i32) {
    %c0_i32 = arith.constant 0 : i32
    %c0_i32_0 = arith.constant 0 : i32
    %c0_i32_1 = arith.constant 0 : i32
    return %c0_i32, %c0_i32_0 : i32, i32
  }
  func.func @transform_7(%arg0: i32) -> (i32, i32) {
    %c0_i32 = arith.constant 0 : i32
    %c0_i32_0 = arith.constant 0 : i32
    %c0_i32_1 = arith.constant 0 : i32
    return %c0_i32, %c0_i32_0 : i32, i32
  }
  func.func @transform_8(%arg0: i32) -> (i32, i32) {
    %c0_i32 = arith.constant 0 : i32
    %c0_i32_0 = arith.constant 0 : i32
    %c0_i32_1 = arith.constant 0 : i32
    return %c0_i32, %c0_i32_0 : i32, i32
  }
  func.func @transform_9(%arg0: i32) -> (i32, i32) {
    %c0_i32 = arith.constant 0 : i32
    %c0_i32_0 = arith.constant 0 : i32
    %c0_i32_1 = arith.constant 0 : i32
    return %c0_i32, %c0_i32_0 : i32, i32
  }
  func.func @transform_10(%arg0: i32) -> (i32, i32) {
    %c0_i32 = arith.constant 0 : i32
    %c0_i32_0 = arith.constant 0 : i32
    %c0_i32_1 = arith.constant 0 : i32
    return %c0_i32, %c0_i32_0 : i32, i32
  }
  func.func @transform_11(%arg0: i32) -> (i32, i32) {
    %c0_i32 = arith.constant 0 : i32
    %c0_i32_0 = arith.constant 0 : i32
    %c0_i32_1 = arith.constant 0 : i32
    return %c0_i32, %c0_i32_0 : i32, i32
  }
  func.func @transform_12(%arg0: i32) -> (i32, i32) {
    %c0_i32 = arith.constant 0 : i32
    %c0_i32_0 = arith.constant 0 : i32
    %c0_i32_1 = arith.constant 0 : i32
    return %c0_i32, %c0_i32_0 : i32, i32
  }
  func.func @transform_13(%arg0: i32) -> (i32, i32, i32) {
    %c0_i32 = arith.constant 0 : i32
    %c0_i32_0 = arith.constant 0 : i32
    %c0_i32_1 = arith.constant 0 : i32
    return %arg0, %c0_i32, %c0_i32_0 : i32, i32, i32
  }
}

</mosaic_0001>

<llo_original>
// kernel: tpu_custom_call.1
$region0: #{tpu_custom_call.1}
  #allocation0 [shape = 'u32[]', space=smem, size = 0x4, offset = 0x4, fixed_abs, tag = 'smem constant byte address 0x4 - core index']
  #allocation1 [shape = 'u32[144,128]{1,0:T(1,128)}', space=vmem, size = 0x12000, scoped, tag = 'internal scratch']
  #allocation2 [shape = 'f32[1,1]{1,0:T(1,128)S(1)}', space=vmem, size = 0x200, scoped, tag = 'scoped memory for tpu_custom_call.1']
  %s0 = inlined_call_operand.vmem [shape: f32[16,49], index: 0, kind: input, shape index: {}]
  %s1 = inlined_call_operand.vmem [shape: f32[2,5], index: 1, kind: input, shape index: {}]
  %s2 = inlined_call_operand.vmem [shape: bf16[49,64], index: 2, kind: input, shape index: {}]
  %s3 = inlined_call_operand.vmem [shape: f32[1,64], index: 3, kind: input, shape index: {}]
  %s4 = inlined_call_operand.vmem [shape: bf16[64,128], index: 4, kind: input, shape index: {}]
  %s5 = inlined_call_operand.vmem [shape: bf16[5,128], index: 5, kind: input, shape index: {}]
  %s6 = inlined_call_operand.vmem [shape: f32[1,128], index: 6, kind: input, shape index: {}]
  %s7 = inlined_call_operand.vmem [shape: bf16[128,256], index: 7, kind: input, shape index: {}]
  %s8 = inlined_call_operand.vmem [shape: f32[1,256], index: 8, kind: input, shape index: {}]
  %s9 = inlined_call_operand.vmem [shape: bf16[256,64], index: 9, kind: input, shape index: {}]
  %s10 = inlined_call_operand.vmem [shape: f32[1,64], index: 10, kind: input, shape index: {}]
  %s11 = inlined_call_operand.vmem [shape: f32[1,64], index: 11, kind: input, shape index: {}]
  %s12 = inlined_call_operand.<no memory space> [shape: f32[1,1], index: 12, kind: input, shape index: {}]
  %s13 = inlined_call_operand.hbm [shape: f32[1,1,2], index: 13, kind: output, shape index: {}]
  %s14 = sld [smem:[#allocation0]]
  $region62: #{tpu_custom_call.1} parent=0
    _
  %s16 = ssub.s32 1, %s14
  %s17 = scalar_select 0, %s16, %s14
  %v18 = vstv %s12
  %19 = vst [vmem:[#allocation2] sm:$0x1] %v18
  $region1: #{tpu_custom_call.1} parent=0
    #allocation3 [shape = 'u8[512]{0}', space=vmem, size = 0x400, scoped, tag = 'output window, operand 0, single buffered']
    #allocation4 [shape = 's32[1]{0}', space=sflag, size = 0x4, scoped, tag = 'scoped memory for tpu_custom_call.1']
    %20 = vsyncpa [#allocation4], 0
    // Predicated region
    $region2: #{tpu_custom_call.1} parent=1 // pred_check
      _
    $region3: #{tpu_custom_call.1} parent=1 // pred_check_branch
      %22 = sbr.rel (0) target = $region5
    $region4: #{tpu_custom_call.1} parent=1 // pred_region
      _
    $region5: #{tpu_custom_call.1} parent=1 // pred_fallthru
      _
    // Predicated region
    $region6: #{tpu_custom_call.1} parent=1 // pred_check
      _
    $region7: #{tpu_custom_call.1} parent=1 // pred_check_branch
      %24 = sbr.rel (0) target = $region9
    $region8: #{tpu_custom_call.1} parent=1 // pred_region
      _
    $region9: #{tpu_custom_call.1} parent=1 // pred_fallthru
      _
    // Predicated region
    $region10: #{tpu_custom_call.1} parent=1 // pred_check
      _
    $region11: #{tpu_custom_call.1} parent=1 // pred_check_branch
      %26 = sbr.rel (0) target = $region13
    $region12: #{tpu_custom_call.1} parent=1 // pred_region
      _
    $region13: #{tpu_custom_call.1} parent=1 // pred_fallthru
      _
    // Predicated region
    $region14: #{tpu_custom_call.1} parent=1 // pred_check
      _
    $region15: #{tpu_custom_call.1} parent=1 // pred_check_branch
      %28 = sbr.rel (0) target = $region17
    $region16: #{tpu_custom_call.1} parent=1 // pred_region
      _
    $region17: #{tpu_custom_call.1} parent=1 // pred_fallthru
      _
    // Predicated region
    $region18: #{tpu_custom_call.1} parent=1 // pred_check
      _
    $region19: #{tpu_custom_call.1} parent=1 // pred_check_branch
      %30 = sbr.rel (0) target = $region21
    $region20: #{tpu_custom_call.1} parent=1 // pred_region
      _
    $region21: #{tpu_custom_call.1} parent=1 // pred_fallthru
      _
    // Predicated region
    $region22: #{tpu_custom_call.1} parent=1 // pred_check
      _
    $region23: #{tpu_custom_call.1} parent=1 // pred_check_branch
      %32 = sbr.rel (0) target = $region25
    $region24: #{tpu_custom_call.1} parent=1 // pred_region
      _
    $region25: #{tpu_custom_call.1} parent=1 // pred_fallthru
      _
    // Predicated region
    $region26: #{tpu_custom_call.1} parent=1 // pred_check
      _
    $region27: #{tpu_custom_call.1} parent=1 // pred_check_branch
      %34 = sbr.rel (0) target = $region29
    $region28: #{tpu_custom_call.1} parent=1 // pred_region
      _
    $region29: #{tpu_custom_call.1} parent=1 // pred_fallthru
      _
    // Predicated region
    $region30: #{tpu_custom_call.1} parent=1 // pred_check
      _
    $region31: #{tpu_custom_call.1} parent=1 // pred_check_branch
      %36 = sbr.rel (0) target = $region33
    $region32: #{tpu_custom_call.1} parent=1 // pred_region
      _
    $region33: #{tpu_custom_call.1} parent=1 // pred_fallthru
      _
    // Predicated region
    $region34: #{tpu_custom_call.1} parent=1 // pred_check
      _
    $region35: #{tpu_custom_call.1} parent=1 // pred_check_branch
      %38 = sbr.rel (0) target = $region37
    $region36: #{tpu_custom_call.1} parent=1 // pred_region
      _
    $region37: #{tpu_custom_call.1} parent=1 // pred_fallthru
      _
    // Predicated region
    $region38: #{tpu_custom_call.1} parent=1 // pred_check
      _
    $region39: #{tpu_custom_call.1} parent=1 // pred_check_branch
      %40 = sbr.rel (0) target = $region41
    $region40: #{tpu_custom_call.1} parent=1 // pred_region
      _
    $region41: #{tpu_custom_call.1} parent=1 // pred_fallthru
      _
    // Predicated region
    $region42: #{tpu_custom_call.1} parent=1 // pred_check
      _
    $region43: #{tpu_custom_call.1} parent=1 // pred_check_branch
      %42 = sbr.rel (0) target = $region45
    $region44: #{tpu_custom_call.1} parent=1 // pred_region
      _
    $region45: #{tpu_custom_call.1} parent=1 // pred_fallthru
      _
    // Predicated region
    $region46: #{tpu_custom_call.1} parent=1 // pred_check
      _
    $region47: #{tpu_custom_call.1} parent=1 // pred_check_branch
      %44 = sbr.rel (0) target = $region49
    $region48: #{tpu_custom_call.1} parent=1 // pred_region
      _
    $region49: #{tpu_custom_call.1} parent=1 // pred_fallthru
      _
    // Predicated region
    $region50: #{tpu_custom_call.1} parent=1 // pred_check
      _
    $region51: #{tpu_custom_call.1} parent=1 // pred_check_branch
      %46 = sbr.rel (0) target = $region53
    $region52: #{tpu_custom_call.1} parent=1 // pred_region
      _
    $region53: #{tpu_custom_call.1} parent=1 // pred_fallthru
      _
    %v48 = vld [vmem:[%s0] sm:$0xff]
    %v49 = vld [vmem:[%s0 + $0x8] sm:$0xff]
    %v50 = vpack.c.bf16 %v49, %v48
    %v51 = vld [vmem:[%s2] sm:$0xf]
    %v52 = vld [vmem:[%s2 + $0x4] sm:$0xf]
    %v53 = vld [vmem:[%s2 + $0x8] sm:$0xf]
    %v54 = vld [vmem:[%s2 + $0xc] sm:$0xf]
    %v55 = vld [vmem:[%s2 + $0x10] sm:$0xf]
    %v56 = vld [vmem:[%s2 + $0x14] sm:$0xf]
    %v57 = vld [vmem:[%s2 + $0x18] sm:$0x1]
    %v58 = vld [vmem:[%s3] sm:$0x1]
    %v60 = vlaneseq
    %v61 = vshrl.u32 %v60, 7
    %v62 = vsub.s32 0, %v61
    %v63 = vrot.slane %v58, %v62
    %v72 = vunpack.c.l.b16 %v51
    %v73 = vunpack.c.l.b16 %v52
    %v74 = vunpack.c.l.b16 %v53
    %v75 = vunpack.c.l.b16 %v54
    %v76 = vunpack.c.l.b16 %v55
    %v77 = vunpack.c.l.b16 %v56
    %v78 = vunpack.c.l.b16 %v57
    %v79 = vpack.c.b16 %v73, %v72
    %v80 = vpack.c.b16 %v75, %v74
    %v81 = vpack.c.b16 %v77, %v76
    %v82 = vpack.c.b16 %v78, %v78
    %vm86 = vcmask 400384
    %v88 = vsel %vm86, %v50, 0
    %vm90 = vcmask 1040384
    %v91 = vsel 0, 4294967295, 65535
    %v92 = vsel %vm90, %v91, 0
    %v94 = vand.u32 %v82, %v92
    %96 = vmatprep.subr.bf16.mxu0 0
    %97 = vmatpush1.bf16.msra.mxu0 %v79
    %98 = vmatprep.subr.bf16.mxu0 0
    %99 = vmatpush1.bf16.msra.mxu0 %v80
    %100 = vmatprep.subr.bf16.mxu0 0
    %101 = vmatpush1.bf16.msra.mxu0 %v81
    %102 = vmatprep.subr.bf16.mxu0 0
    %103 = vmatpush1.bf16.msra.mxu0 %v94
    %104 = vmatprep.subr.bf16.mxu0 0
    %105 = vmatpush1.bf16.msra.mxu0 0
    %106 = vmatprep.subr.bf16.mxu0 0
    %107 = vmatpush1.bf16.msra.mxu0 0
    %108 = vmatprep.subr.bf16.mxu0 0
    %109 = vmatpush1.bf16.msra.mxu0 0
    %110 = vmatprep.subr.bf16.mxu0 0
    %111 = vmatpush1.bf16.msra.mxu0 0
    %112 = vmatprep.subr.bf16.mxu0 0
    %113 = vmatpush1.bf16.msra.mxu0 0
    %114 = vmatprep.subr.bf16.mxu0 0
    %115 = vmatpush1.bf16.msra.mxu0 0
    %116 = vmatprep.subr.bf16.mxu0 0
    %117 = vmatpush1.bf16.msra.mxu0 0
    %118 = vmatprep.subr.bf16.mxu0 0
    %119 = vmatpush1.bf16.msra.mxu0 0
    %120 = vmatprep.subr.bf16.mxu0 0
    %121 = vmatpush1.bf16.msra.mxu0 0
    %122 = vmatprep.subr.bf16.mxu0 0
    %123 = vmatpush1.bf16.msra.mxu0 0
    %124 = vmatprep.subr.bf16.mxu0 0
    %125 = vmatpush1.bf16.msra.mxu0 0
    %126 = vmatprep.subr.bf16.mxu0 0
    %127 = vmatpush1.bf16.msra.mxu0 0
    %128 = vmatprep.mubr.bf16.mxu0 0
    %129 = vmatmul.mubr.bf16.gmra.mrb[0].mxu0 %v88
    %v130 = vpop.f32.mrb[0].mxu0
    %v131 = vadd.f32 %v63, %v130
    %v132 = vpop.f32.mrb[0].mxu0
    %v133 = vpop.f32.mrb[0].mxu0
    %v134 = vadd.f32 %v63, %v133
    %v135 = vpop.f32.mrb[0].mxu0
    %136 = vdwg.mxu0
    %v137 = vlaneseq
    %v138 = vshrl.u32 %v137, 7
    %v139 = vsub.s32 7, %v138
    %v140 = vrot.slane %v131, %v139
    %v141 = vlaneseq
    %v142 = vshrl.u32 %v141, 7
    %v143 = vsub.s32 7, %v142
    %v144 = vrot.slane %v134, %v143
    %v145 = vmul.f32 %v131, %v140
    %v146 = vmul.f32 %v134, %v144
    %vm147 = vcmask 523264
    %v148 = vsel %vm147, %v145, 0.0
    %149 = vadd.xlane.f32.xlu0 %v148
    %v150 = vpop.xlane.xlu0 %149
    %v151 = vsel %vm147, %v146, 0.0
    %152 = vadd.xlane.f32.xlu0 %v151
    %v153 = vpop.xlane.xlu0 %152
    %v156 = vlaneseq
    %v157 = vand.u32 %v156, 127
    %v158 = vlaneseq
    %v159 = vshrl.u32 %v158, 7
    %v160 = vsub.s32 %v157, %v159
    %v161 = vrot.slane %v150, %v160
    %v162 = vlaneseq
    %v163 = vshrl.u32 %v162, 7
    %v164 = vsub.s32 %v157, %v163
    %v165 = vrot.slane %v153, %v164
    %vm166 = vcmask 1041409
    %v167 = vsel %vm166, %v165, %v161
    %vm169 = vcmask 58368
    %v170 = vsel %vm169, %v167, -inf
    %171 = vmax.xlane.f32.xlu0 %v170
    %v172 = vpop.xlane.xlu0 %171
    %v174 = vlaneseq
    %v175 = vshrl.u32 %v174, 7
    %v176 = vsub.s32 0, %v175
    %v177 = vrot.slane %v172, %v176
    %v178 = vlaneseq
    %v179 = vshrl.u32 %v178, 7
    %v180 = vsub.s32 1, %v179
    %v181 = vrot.slane %v172, %v180
    %v184 = vsub.f32 %v150, %v177
    %v185 = vsub.f32 %v153, %v181
    %v186 = vmul.f32 %v184, 1.442695
    %v187 = vpow.pop %v186
    %v188 = vmul.f32 %v185, 1.442695
    %v189 = vpow.pop %v188
    %192 = vset.pattern.permute.xlu0 0
    %193 = vperm.xlu0 %192, %v187
    %v194 = vpop.permute.xlu0 %193
    %195 = vset.pattern.permute.xlu0 0
    %196 = vperm.xlu0 %195, %v189
    %v197 = vpop.permute.xlu0 %196
    %v198 = vlaneseq
    %v199 = vshrl.u32 %v198, 7
    %v200 = vsub.s32 %v157, %v199
    %v201 = vrot.slane %v194, %v200
    %v202 = vlaneseq
    %v203 = vshrl.u32 %v202, 7
    %v204 = vsub.s32 %v157, %v203
    %v205 = vrot.slane %v197, %v204
    %v206 = vsel %vm166, %v205, %v201
    %v208 = vsel %vm169, %v206, 0.0
    %209 = vadd.xlane.f32.xlu0 %v208
    %v210 = vpop.xlane.xlu0 %209
    %v211 = vrcp.pop %v210
    %v213 = vlaneseq
    %v214 = vshrl.u32 %v213, 7
    %v215 = vsub.s32 0, %v214
    %v216 = vrot.slane %v211, %v215
    %v217 = vlaneseq
    %v218 = vshrl.u32 %v217, 7
    %v219 = vsub.s32 1, %v218
    %v220 = vrot.slane %v211, %v219
    %v223 = vmul.f32 %v187, %v216
    %v224 = vmul.f32 %v189, %v220
    %226 = vset.pattern.permute.xlu0 0
    %227 = vperm.xlu0 %226, %v223
    %v228 = vpop.permute.xlu0 %227
    %231 = vset.pattern.permute.xlu0 0
    %232 = vperm.xlu0 %231, %v224
    %v233 = vpop.permute.xlu0 %232
    %v235 = vmul.f32 %v131, %v228
    %v236 = vmul.f32 %v134, %v233
    %v237 = vsel %vm147, %v235, 0.0
    %v238 = vrot.slane %v237, 4
    %v239 = vadd.f32 %v237, %v238
    %v240 = vrot.slane %v239, 2
    %v241 = vadd.f32 %v239, %v240
    %v242 = vrot.slane %v241, 1
    %v243 = vadd.f32 %v241, %v242
    %v244 = vsel %vm147, %v236, 0.0
    %v245 = vrot.slane %v244, 4
    %v246 = vadd.f32 %v244, %v245
    %v247 = vrot.slane %v246, 2
    %v248 = vadd.f32 %v246, %v247
    %v249 = vrot.slane %v248, 1
    %v250 = vadd.f32 %v248, %v249
    %v251 = vpack.c.bf16 %v243, %v243
    %v252 = vpack.c.bf16 %v250, %v250
    %v253 = vld [vmem:[%s4] sm:$0xf]
    %v254 = vld [vmem:[%s4 + $0x4] sm:$0xf]
    %v255 = vld [vmem:[%s4 + $0x8] sm:$0xf]
    %v256 = vld [vmem:[%s4 + $0xc] sm:$0xf]
    %v257 = vld [vmem:[%s4 + $0x10] sm:$0xf]
    %v258 = vld [vmem:[%s4 + $0x14] sm:$0xf]
    %v259 = vld [vmem:[%s4 + $0x18] sm:$0xf]
    %v260 = vld [vmem:[%s4 + $0x1c] sm:$0xf]
    %v261 = vld [vmem:[%s1] sm:$0x3]
    %v262 = vpack.c.bf16 %v261, %v261
    %v263 = vld [vmem:[%s5] sm:$0x7]
    %vm264 = vcmask 39936
    %v266 = vsel %vm264, %v262, 0
    %vm268 = vcmask 1041408
    %vm269 = vcmask 1042432
    %v270 = vsel %vm268, 4294967295, 65535
    %v271 = vsel %vm269, %v270, 0
    %v273 = vand.u32 %v263, %v271
    %275 = vmatprep.subr.bf16.mxu0 0
    %276 = vmatpush1.bf16.msra.mxu0 %v273
    %277 = vmatprep.subr.bf16.mxu0 0
    %278 = vmatpush1.bf16.msra.mxu0 0
    %279 = vmatprep.subr.bf16.mxu0 0
    %280 = vmatpush1.bf16.msra.mxu0 0
    %281 = vmatprep.subr.bf16.mxu0 0
    %282 = vmatpush1.bf16.msra.mxu0 0
    %283 = vmatprep.subr.bf16.mxu0 0
    %284 = vmatpush1.bf16.msra.mxu0 0
    %285 = vmatprep.subr.bf16.mxu0 0
    %286 = vmatpush1.bf16.msra.mxu0 0
    %287 = vmatprep.subr.bf16.mxu0 0
    %288 = vmatpush1.bf16.msra.mxu0 0
    %289 = vmatprep.subr.bf16.mxu0 0
    %290 = vmatpush1.bf16.msra.mxu0 0
    %291 = vmatprep.subr.bf16.mxu0 0
    %292 = vmatpush1.bf16.msra.mxu0 0
    %293 = vmatprep.subr.bf16.mxu0 0
    %294 = vmatpush1.bf16.msra.mxu0 0
    %295 = vmatprep.subr.bf16.mxu0 0
    %296 = vmatpush1.bf16.msra.mxu0 0
    %297 = vmatprep.subr.bf16.mxu0 0
    %298 = vmatpush1.bf16.msra.mxu0 0
    %299 = vmatprep.subr.bf16.mxu0 0
    %300 = vmatpush1.bf16.msra.mxu0 0
    %301 = vmatprep.subr.bf16.mxu0 0
    %302 = vmatpush1.bf16.msra.mxu0 0
    %303 = vmatprep.subr.bf16.mxu0 0
    %304 = vmatpush1.bf16.msra.mxu0 0
    %305 = vmatprep.subr.bf16.mxu0 0
    %306 = vmatpush1.bf16.msra.mxu0 0
    %307 = vmatprep.mubr.bf16.mxu0 0
    %308 = vmatmul.mubr.bf16.gmra.mrb[0].mxu0 %v266
    %v309 = vpop.f32.mrb[0].mxu0
    %v310 = vadd.f32 0.0, %v309
    %v311 = vpop.f32.mrb[0].mxu0
    %v312 = vpop.f32.mrb[0].mxu0
    %v313 = vpop.f32.mrb[0].mxu0
    %314 = vdwg.mxu0
    %v317 = vunpack.c.l.b16 %v251
    %v318 = vunpack.c.l.b16 %v252
    %v319 = vsel %vm166, %v318, %v317
    %v320 = vpack.c.b16 %v319, %v319
    %v329 = vunpack.c.l.b16 %v253
    %v330 = vunpack.c.l.b16 %v254
    %v331 = vunpack.c.l.b16 %v255
    %v332 = vunpack.c.l.b16 %v256
    %v333 = vunpack.c.l.b16 %v257
    %v334 = vunpack.c.l.b16 %v258
    %v335 = vunpack.c.l.b16 %v259
    %v336 = vunpack.c.l.b16 %v260
    %v337 = vpack.c.b16 %v330, %v329
    %v338 = vpack.c.b16 %v332, %v331
    %v339 = vpack.c.b16 %v334, %v333
    %v340 = vpack.c.b16 %v336, %v335
    %v346 = vsel %vm147, %v320, 0
    %348 = vmatprep.subr.bf16.mxu0 0
    %349 = vmatpush1.bf16.msra.mxu0 %v337
    %350 = vmatprep.subr.bf16.mxu0 0
    %351 = vmatpush1.bf16.msra.mxu0 %v338
    %352 = vmatprep.subr.bf16.mxu0 0
    %353 = vmatpush1.bf16.msra.mxu0 %v339
    %354 = vmatprep.subr.bf16.mxu0 0
    %355 = vmatpush1.bf16.msra.mxu0 %v340
    %356 = vmatprep.subr.bf16.mxu0 0
    %357 = vmatpush1.bf16.msra.mxu0 0
    %358 = vmatprep.subr.bf16.mxu0 0
    %359 = vmatpush1.bf16.msra.mxu0 0
    %360 = vmatprep.subr.bf16.mxu0 0
    %361 = vmatpush1.bf16.msra.mxu0 0
    %362 = vmatprep.subr.bf16.mxu0 0
    %363 = vmatpush1.bf16.msra.mxu0 0
    %364 = vmatprep.subr.bf16.mxu0 0
    %365 = vmatpush1.bf16.msra.mxu0 0
    %366 = vmatprep.subr.bf16.mxu0 0
    %367 = vmatpush1.bf16.msra.mxu0 0
    %368 = vmatprep.subr.bf16.mxu0 0
    %369 = vmatpush1.bf16.msra.mxu0 0
    %370 = vmatprep.subr.bf16.mxu0 0
    %371 = vmatpush1.bf16.msra.mxu0 0
    %372 = vmatprep.subr.bf16.mxu0 0
    %373 = vmatpush1.bf16.msra.mxu0 0
    %374 = vmatprep.subr.bf16.mxu0 0
    %375 = vmatpush1.bf16.msra.mxu0 0
    %376 = vmatprep.subr.bf16.mxu0 0
    %377 = vmatpush1.bf16.msra.mxu0 0
    %378 = vmatprep.subr.bf16.mxu0 0
    %379 = vmatpush1.bf16.msra.mxu0 0
    %380 = vmatprep.mubr.bf16.mxu0 0
    %381 = vmatmul.mubr.bf16.gmra.mrb[0].mxu0 %v346
    %v382 = vpop.f32.mrb[0].mxu0
    %v383 = vadd.f32 %v310, %v382
    %v384 = vpop.f32.mrb[0].mxu0
    %v385 = vpop.f32.mrb[0].mxu0
    %v386 = vpop.f32.mrb[0].mxu0
    %387 = vdwg.mxu0
    %v388 = vld [vmem:[%s6] sm:$0x1]
    %v390 = vlaneseq
    %v391 = vshrl.u32 %v390, 7
    %v392 = vsub.s32 0, %v391
    %v393 = vrot.slane %v388, %v392
    %v395 = vadd.f32 %v383, %v393
    %v396 = vmax.f32 %v395, 0.0
    %v397 = vpack.c.bf16 %v396, %v396
    %v398 = vld [vmem:[%s7] sm:$0xff]
    %v399 = vld [vmem:[%s7 + $0x8] sm:$0xff]
    %v400 = vld [vmem:[%s7 + $0x10] sm:$0xff]
    %v401 = vld [vmem:[%s7 + $0x18] sm:$0xff]
    %v402 = vld [vmem:[%s7 + $0x20] sm:$0xff]
    %v403 = vld [vmem:[%s7 + $0x28] sm:$0xff]
    %v404 = vld [vmem:[%s7 + $0x30] sm:$0xff]
    %v405 = vld [vmem:[%s7 + $0x38] sm:$0xff]
    %v406 = vld [vmem:[%s7 + $0x40] sm:$0xff]
    %v407 = vld [vmem:[%s7 + $0x48] sm:$0xff]
    %v408 = vld [vmem:[%s7 + $0x50] sm:$0xff]
    %v409 = vld [vmem:[%s7 + $0x58] sm:$0xff]
    %v410 = vld [vmem:[%s7 + $0x60] sm:$0xff]
    %v411 = vld [vmem:[%s7 + $0x68] sm:$0xff]
    %v412 = vld [vmem:[%s7 + $0x70] sm:$0xff]
    %v413 = vld [vmem:[%s7 + $0x78] sm:$0xff]
    %v414 = vld [vmem:[%s8] sm:$0x3]
    %v416 = vlaneseq
    %v417 = vshrl.u32 %v416, 7
    %v418 = vsub.s32 0, %v417
    %v419 = vrot.slane %v414, %v418
    %v420 = vlaneseq
    %v421 = vshrl.u32 %v420, 7
    %v422 = vsub.s32 1, %v421
    %v423 = vrot.slane %v414, %v422
    %v442 = vunpack.c.l.b16 %v398
    %v443 = vunpack.c.h.b16 %v398
    %v444 = vunpack.c.l.b16 %v399
    %v445 = vunpack.c.h.b16 %v399
    %v446 = vunpack.c.l.b16 %v400
    %v447 = vunpack.c.h.b16 %v400
    %v448 = vunpack.c.l.b16 %v401
    %v449 = vunpack.c.h.b16 %v401
    %v450 = vunpack.c.l.b16 %v402
    %v451 = vunpack.c.h.b16 %v402
    %v452 = vunpack.c.l.b16 %v403
    %v453 = vunpack.c.h.b16 %v403
    %v454 = vunpack.c.l.b16 %v404
    %v455 = vunpack.c.h.b16 %v404
    %v456 = vunpack.c.l.b16 %v405
    %v457 = vunpack.c.h.b16 %v405
    %v458 = vunpack.c.l.b16 %v406
    %v459 = vunpack.c.h.b16 %v406
    %v460 = vunpack.c.l.b16 %v407
    %v461 = vunpack.c.h.b16 %v407
    %v462 = vunpack.c.l.b16 %v408
    %v463 = vunpack.c.h.b16 %v408
    %v464 = vunpack.c.l.b16 %v409
    %v465 = vunpack.c.h.b16 %v409
    %v466 = vunpack.c.l.b16 %v410
    %v467 = vunpack.c.h.b16 %v410
    %v468 = vunpack.c.l.b16 %v411
    %v469 = vunpack.c.h.b16 %v411
    %v470 = vunpack.c.l.b16 %v412
    %v471 = vunpack.c.h.b16 %v412
    %v472 = vunpack.c.l.b16 %v413
    %v473 = vunpack.c.h.b16 %v413
    %v474 = vpack.c.b16 %v444, %v442
    %v475 = vpack.c.b16 %v445, %v443
    %v476 = vpack.c.b16 %v448, %v446
    %v477 = vpack.c.b16 %v449, %v447
    %v478 = vpack.c.b16 %v452, %v450
    %v479 = vpack.c.b16 %v453, %v451
    %v480 = vpack.c.b16 %v456, %v454
    %v481 = vpack.c.b16 %v457, %v455
    %v482 = vpack.c.b16 %v460, %v458
    %v483 = vpack.c.b16 %v461, %v459
    %v484 = vpack.c.b16 %v464, %v462
    %v485 = vpack.c.b16 %v465, %v463
    %v486 = vpack.c.b16 %v468, %v466
    %v487 = vpack.c.b16 %v469, %v467
    %v488 = vpack.c.b16 %v472, %v470
    %v489 = vpack.c.b16 %v473, %v471
    %506 = vmatprep.subr.bf16.mxu0 %v475
    %507 = vmatpush1.bf16.msra.mxu0 %v474
    %508 = vmatprep.subr.bf16.mxu0 %v477
    %509 = vmatpush1.bf16.msra.mxu0 %v476
    %510 = vmatprep.subr.bf16.mxu0 %v479
    %511 = vmatpush1.bf16.msra.mxu0 %v478
    %512 = vmatprep.subr.bf16.mxu0 %v481
    %513 = vmatpush1.bf16.msra.mxu0 %v480
    %514 = vmatprep.subr.bf16.mxu0 %v483
    %515 = vmatpush1.bf16.msra.mxu0 %v482
    %516 = vmatprep.subr.bf16.mxu0 %v485
    %517 = vmatpush1.bf16.msra.mxu0 %v484
    %518 = vmatprep.subr.bf16.mxu0 %v487
    %519 = vmatpush1.bf16.msra.mxu0 %v486
    %520 = vmatprep.subr.bf16.mxu0 %v489
    %521 = vmatpush1.bf16.msra.mxu0 %v488
    %522 = vmatprep.subr.bf16.mxu0 0
    %523 = vmatpush1.bf16.msra.mxu0 0
    %524 = vmatprep.subr.bf16.mxu0 0
    %525 = vmatpush1.bf16.msra.mxu0 0
    %526 = vmatprep.subr.bf16.mxu0 0
    %527 = vmatpush1.bf16.msra.mxu0 0
    %528 = vmatprep.subr.bf16.mxu0 0
    %529 = vmatpush1.bf16.msra.mxu0 0
    %530 = vmatprep.subr.bf16.mxu0 0
    %531 = vmatpush1.bf16.msra.mxu0 0
    %532 = vmatprep.subr.bf16.mxu0 0
    %533 = vmatpush1.bf16.msra.mxu0 0
    %534 = vmatprep.subr.bf16.mxu0 0
    %535 = vmatpush1.bf16.msra.mxu0 0
    %536 = vmatprep.subr.bf16.mxu0 0
    %537 = vmatpush1.bf16.msra.mxu0 0
    %538 = vmatprep.mubr.bf16.mxu0 0
    %539 = vmatmul.mubr.bf16.gmra.mrb[0].mxu0 %v397
    %v540 = vpop.f32.mrb[0].mxu0
    %v541 = vadd.f32 %v419, %v540
    %v542 = vpop.f32.mrb[0].mxu0
    %v543 = vadd.f32 %v423, %v542
    %v544 = vpop.f32.mrb[0].mxu0
    %v545 = vpop.f32.mrb[0].mxu0
    %546 = vdwg.mxu0
    %v547 = vmax.f32 %v541, 0.0
    %v548 = vmax.f32 %v543, 0.0
    %v549 = vpack.c.bf16 %v547, %v547
    %v550 = vpack.c.bf16 %v548, %v548
    %v551 = vld [vmem:[%s9] sm:$0xf]
    %v552 = vld [vmem:[%s9 + $0x4] sm:$0xf]
    %v553 = vld [vmem:[%s9 + $0x8] sm:$0xf]
    %v554 = vld [vmem:[%s9 + $0xc] sm:$0xf]
    %v555 = vld [vmem:[%s9 + $0x10] sm:$0xf]
    %v556 = vld [vmem:[%s9 + $0x14] sm:$0xf]
    %v557 = vld [vmem:[%s9 + $0x18] sm:$0xf]
    %v558 = vld [vmem:[%s9 + $0x1c] sm:$0xf]
    %v559 = vld [vmem:[%s9 + $0x20] sm:$0xf]
    %v560 = vld [vmem:[%s9 + $0x24] sm:$0xf]
    %v561 = vld [vmem:[%s9 + $0x28] sm:$0xf]
    %v562 = vld [vmem:[%s9 + $0x2c] sm:$0xf]
    %v563 = vld [vmem:[%s9 + $0x30] sm:$0xf]
    %v564 = vld [vmem:[%s9 + $0x34] sm:$0xf]
    %v565 = vld [vmem:[%s9 + $0x38] sm:$0xf]
    %v566 = vld [vmem:[%s9 + $0x3c] sm:$0xf]
    %v567 = vld [vmem:[%s9 + $0x40] sm:$0xf]
    %v568 = vld [vmem:[%s9 + $0x44] sm:$0xf]
    %v569 = vld [vmem:[%s9 + $0x48] sm:$0xf]
    %v570 = vld [vmem:[%s9 + $0x4c] sm:$0xf]
    %v571 = vld [vmem:[%s9 + $0x50] sm:$0xf]
    %v572 = vld [vmem:[%s9 + $0x54] sm:$0xf]
    %v573 = vld [vmem:[%s9 + $0x58] sm:$0xf]
    %v574 = vld [vmem:[%s9 + $0x5c] sm:$0xf]
    %v575 = vld [vmem:[%s9 + $0x60] sm:$0xf]
    %v576 = vld [vmem:[%s9 + $0x64] sm:$0xf]
    %v577 = vld [vmem:[%s9 + $0x68] sm:$0xf]
    %v578 = vld [vmem:[%s9 + $0x6c] sm:$0xf]
    %v579 = vld [vmem:[%s9 + $0x70] sm:$0xf]
    %v580 = vld [vmem:[%s9 + $0x74] sm:$0xf]
    %v581 = vld [vmem:[%s9 + $0x78] sm:$0xf]
    %v582 = vld [vmem:[%s9 + $0x7c] sm:$0xf]
    %v583 = vld [vmem:[%s10] sm:$0x1]
    %v585 = vlaneseq
    %v586 = vshrl.u32 %v585, 7
    %v587 = vsub.s32 0, %v586
    %v588 = vrot.slane %v583, %v587
    %v622 = vunpack.c.l.b16 %v551
    %v623 = vunpack.c.l.b16 %v552
    %v624 = vunpack.c.l.b16 %v553
    %v625 = vunpack.c.l.b16 %v554
    %v626 = vunpack.c.l.b16 %v555
    %v627 = vunpack.c.l.b16 %v556
    %v628 = vunpack.c.l.b16 %v557
    %v629 = vunpack.c.l.b16 %v558
    %v630 = vunpack.c.l.b16 %v559
    %v631 = vunpack.c.l.b16 %v560
    %v632 = vunpack.c.l.b16 %v561
    %v633 = vunpack.c.l.b16 %v562
    %v634 = vunpack.c.l.b16 %v563
    %v635 = vunpack.c.l.b16 %v564
    %v636 = vunpack.c.l.b16 %v565
    %v637 = vunpack.c.l.b16 %v566
    %v638 = vunpack.c.l.b16 %v567
    %v639 = vunpack.c.l.b16 %v568
    %v640 = vunpack.c.l.b16 %v569
    %v641 = vunpack.c.l.b16 %v570
    %v642 = vunpack.c.l.b16 %v571
    %v643 = vunpack.c.l.b16 %v572
    %v644 = vunpack.c.l.b16 %v573
    %v645 = vunpack.c.l.b16 %v574
    %v646 = vunpack.c.l.b16 %v575
    %v647 = vunpack.c.l.b16 %v576
    %v648 = vunpack.c.l.b16 %v577
    %v649 = vunpack.c.l.b16 %v578
    %v650 = vunpack.c.l.b16 %v579
    %v651 = vunpack.c.l.b16 %v580
    %v652 = vunpack.c.l.b16 %v581
    %v653 = vunpack.c.l.b16 %v582
    %v654 = vpack.c.b16 %v623, %v622
    %v655 = vpack.c.b16 %v625, %v624
    %v656 = vpack.c.b16 %v627, %v626
    %v657 = vpack.c.b16 %v629, %v628
    %v658 = vpack.c.b16 %v631, %v630
    %v659 = vpack.c.b16 %v633, %v632
    %v660 = vpack.c.b16 %v635, %v634
    %v661 = vpack.c.b16 %v637, %v636
    %v662 = vpack.c.b16 %v639, %v638
    %v663 = vpack.c.b16 %v641, %v640
    %v664 = vpack.c.b16 %v643, %v642
    %v665 = vpack.c.b16 %v645, %v644
    %v666 = vpack.c.b16 %v647, %v646
    %v667 = vpack.c.b16 %v649, %v648
    %v668 = vpack.c.b16 %v651, %v650
    %v669 = vpack.c.b16 %v653, %v652
    %686 = vmatprep.subr.bf16.mxu0 0
    %687 = vmatpush1.bf16.msra.mxu0 %v654
    %688 = vmatprep.subr.bf16.mxu0 0
    %689 = vmatpush1.bf16.msra.mxu0 %v655
    %690 = vmatprep.subr.bf16.mxu0 0
    %691 = vmatpush1.bf16.msra.mxu0 %v656
    %692 = vmatprep.subr.bf16.mxu0 0
    %693 = vmatpush1.bf16.msra.mxu0 %v657
    %694 = vmatprep.subr.bf16.mxu0 0
    %695 = vmatpush1.bf16.msra.mxu0 %v658
    %696 = vmatprep.subr.bf16.mxu0 0
    %697 = vmatpush1.bf16.msra.mxu0 %v659
    %698 = vmatprep.subr.bf16.mxu0 0
    %699 = vmatpush1.bf16.msra.mxu0 %v660
    %700 = vmatprep.subr.bf16.mxu0 0
    %701 = vmatpush1.bf16.msra.mxu0 %v661
    %702 = vmatprep.subr.bf16.mxu0 0
    %703 = vmatpush1.bf16.msra.mxu0 %v662
    %704 = vmatprep.subr.bf16.mxu0 0
    %705 = vmatpush1.bf16.msra.mxu0 %v663
    %706 = vmatprep.subr.bf16.mxu0 0
    %707 = vmatpush1.bf16.msra.mxu0 %v664
    %708 = vmatprep.subr.bf16.mxu0 0
    %709 = vmatpush1.bf16.msra.mxu0 %v665
    %710 = vmatprep.subr.bf16.mxu0 0
    %711 = vmatpush1.bf16.msra.mxu0 %v666
    %712 = vmatprep.subr.bf16.mxu0 0
    %713 = vmatpush1.bf16.msra.mxu0 %v667
    %714 = vmatprep.subr.bf16.mxu0 0
    %715 = vmatpush1.bf16.msra.mxu0 %v668
    %716 = vmatprep.subr.bf16.mxu0 0
    %717 = vmatpush1.bf16.msra.mxu0 %v669
    %718 = vmatprep.mubr.bf16.mxu0 %v550
    %719 = vmatmul.mubr.bf16.gmra.mrb[0].mxu0 %v549
    %v720 = vpop.f32.mrb[0].mxu0
    %v721 = vadd.f32 %v588, %v720
    %v722 = vpop.f32.mrb[0].mxu0
    %v723 = vpop.f32.mrb[0].mxu0
    %v724 = vpop.f32.mrb[0].mxu0
    %725 = vdwg.mxu0
    %v726 = vmax.f32 %v721, 0.0
    %v727 = vld [vmem:[%s11] sm:$0x1]
    %v729 = vlaneseq
    %v730 = vshrl.u32 %v729, 7
    %v731 = vsub.s32 0, %v730
    %v732 = vrot.slane %v727, %v731
    %v734 = vmul.f32 %v726, %v732
    %vm735 = vcmask 517120
    %v736 = vsel %vm735, %v734, 0.0
    %737 = vadd.xlane.f32.xlu0 %v736
    %v738 = vpop.xlane.xlu0 %737
    %v739 = vld [vmem:[#allocation2] sm:$0x1]
    %v741 = vlaneseq
    %v742 = vshrl.u32 %v741, 7
    %v743 = vsub.s32 0, %v742
    %v744 = vrot.slane %v739, %v743
    %v746 = vadd.f32 %v738, %v744
    %747 = vxpose.xlu0.b32.start [1/16] %v746, 128
    %748 = vxpose.xlu0.b32.cont [2/16] 0.0, 128
    %749 = vxpose.xlu0.b32.cont [3/16] 0.0, 128
    %750 = vxpose.xlu0.b32.cont [4/16] 0.0, 128
    %751 = vxpose.xlu0.b32.cont [5/16] 0.0, 128
    %752 = vxpose.xlu0.b32.cont [6/16] 0.0, 128
    %753 = vxpose.xlu0.b32.cont [7/16] 0.0, 128
    %754 = vxpose.xlu0.b32.cont [8/16] 0.0, 128
    %755 = vxpose.xlu0.b32.cont [9/16] 0.0, 128
    %756 = vxpose.xlu0.b32.cont [10/16] 0.0, 128
    %757 = vxpose.xlu0.b32.cont [11/16] 0.0, 128
    %758 = vxpose.xlu0.b32.cont [12/16] 0.0, 128
    %759 = vxpose.xlu0.b32.cont [13/16] 0.0, 128
    %760 = vxpose.xlu0.b32.cont [14/16] 0.0, 128
    %761 = vxpose.xlu0.b32.cont [15/16] 0.0, 128
    %762 = vxpose.xlu0.b32.end [16/16] 0.0, 128
    %v763 = vpop.trf.xlu0
    %v764 = vpop.trf.xlu0
    %v765 = vpop.trf.xlu0
    %v766 = vpop.trf.xlu0
    %v767 = vpop.trf.xlu0
    %v768 = vpop.trf.xlu0
    %v769 = vpop.trf.xlu0
    %v770 = vpop.trf.xlu0
    %v771 = vpop.trf.xlu0
    %v772 = vpop.trf.xlu0
    %v773 = vpop.trf.xlu0
    %v774 = vpop.trf.xlu0
    %v775 = vpop.trf.xlu0
    %v776 = vpop.trf.xlu0
    %v777 = vpop.trf.xlu0
    %v778 = vpop.trf.xlu0
    %v779 = vxor.u32 %v763, 2147483648
    %v780 = vmul.f32 %v779, 1.442695
    %v781 = vpow.pop %v780
    %v782 = vadd.f32 %v781, 1.0
    %v783 = vrcp.pop %v782
    %v784 = vmul.f32 1.0, %v783
    %vm785 = vcmask 8192
    %786 = vst.msk [vmem:[#allocation3] sm:$0x1] %vm785, %v784
    // Predicated region
    $region54: #{tpu_custom_call.1} parent=1 // pred_check
      _
    $region55: #{tpu_custom_call.1} parent=1 // pred_check_branch
      %788 = sbr.rel (0) target = $region57
    $region56: #{tpu_custom_call.1} parent=1 // pred_region
      %s790 = ssub.s32 16, 16
      %791 = vsyncadd [#allocation4], %s790
      %s793 = sshll.u32 [#allocation3], 4
      %s794 = int_to_ptr.vmem [resolvable:$true] %s793
      %796 = dma.vmem_to_hbm [thread:$0]  %s794, 16, %s13, [#allocation4]
    $region57: #{tpu_custom_call.1} parent=1 // pred_fallthru
      _
    // Predicated region
    $region58: #{tpu_custom_call.1} parent=1 // pred_check
      _
    $region59: #{tpu_custom_call.1} parent=1 // pred_check_branch
      %798 = sbr.rel (0) target = $region61
    $region60: #{tpu_custom_call.1} parent=1 // pred_region
      %799 = dma.done [#allocation4], 16
    $region61: #{tpu_custom_call.1} parent=1 // pred_fallthru
      _
    %800 = vsyncpa [#allocation4], 1

</llo_original>
